<compile_context>
chip_gen: v5e
topology: v5e:2x2
jax: 0.10.0
libtpu: 0.0.40
codegen_flags: <defaults>
</compile_context>

<pallas_src>
import functools

import jax
import jax.numpy as jnp
from jax import lax
from jax.experimental import pallas as pl
from jax.experimental.pallas import tpu as pltpu


LANE = 128          # output-channel padding granularity (lane-dense stores / MXU width)
FIRST_K_PAD = 128   # first conv's K (9 taps * 3 ch = 27) padded to a lane-dense width


def _round_up(x, m):
    return (x + m - 1) // m * m


# ---------------------------------------------------------------------------
# Pallas kernels
# ---------------------------------------------------------------------------
def conv_tap_kernel(x_ref, w_ref, b_ref, o_ref, *, taps, oh, ow, relu, flat):
    """Direct conv (stride-1 form) for one image x one OC tile.

    x_ref: (1, PH, PW, Cin)   padded (or space-to-depth'ed / im2col'ed) input
    w_ref: (T, Cin, TOC)      packed weights for this OC tile
    b_ref: (1, TOC)           bias (f32)
    o_ref: (1, OH, OW, TOC)
    """
    cin = x_ref.shape[-1]
    toc = o_ref.shape[-1]
    bias = b_ref[...]                                      # (1, TOC) f32

    if flat:
        # One matmul per tap over all OH*OW output pixels (layout-preserving reshape:
        # OW is a multiple of 8 and Cin/TOC are multiples of 128 on this path).
        acc = jnp.zeros((oh * ow, toc), jnp.float32)
        for t, (i, j) in enumerate(taps):
            lhs = x_ref[0, i:i + oh, j:j + ow, :].reshape(oh * ow, cin)
            acc = acc + jnp.dot(lhs, w_ref[t], preferred_element_type=jnp.float32)
        acc = acc + bias
        if relu:
            acc = jnp.maximum(acc, 0.0)
        o_ref[...] = acc.reshape(1, oh, ow, toc).astype(o_ref.dtype)
    else:
        # Reshape-free row-wise path for small spatial layers (OW not 8-aligned).
        for y in range(oh):
            acc = jnp.zeros((ow, toc), jnp.float32)
            for t, (i, j) in enumerate(taps):
                lhs = x_ref[0, y + i, j:j + ow, :]          # (OW, Cin)
                acc = acc + jnp.dot(lhs, w_ref[t], preferred_element_type=jnp.float32)
            acc = acc + bias
            if relu:
                acc = jnp.maximum(acc, 0.0)
            o_ref[0, y, :, :] = acc.astype(o_ref.dtype)


def trunk_head_kernel(x_ref, w_ref, b_ref, lw_ref, lb_ref, o_ref, *, taps, oh, ow, flat):
    """Trunk conv3x3 (256->512) + ReLU + global spatial sum + linear(512->1), fused.

    x_ref: (N, PH, PW, 256), w_ref: (9, 256, 512), b_ref: (1, 512) f32,
    lw_ref: (512, 1) f32, lb_ref: (1, 1) f32, o_ref: (N, 1) f32.
    """
    n = x_ref.shape[0]
    cin = x_ref.shape[-1]
    oc = w_ref.shape[-1]
    bias = b_ref[...]

    if flat:
        m = n * oh * ow
        acc = jnp.zeros((m, oc), jnp.float32)
        for t, (i, j) in enumerate(taps):
            lhs = x_ref[:, i:i + oh, j:j + ow, :].reshape(m, cin)
            acc = acc + jnp.dot(lhs, w_ref[t], preferred_element_type=jnp.float32)
        acc = jnp.maximum(acc + bias, 0.0)
        s = oh * ow
        for b in range(n):
            hb = jnp.sum(acc[b * s:(b + 1) * s, :], axis=0, keepdims=True)     # (1, OC)
            o_ref[pl.ds(b, 1), :] = (
                jnp.dot(hb, lw_ref[...], preferred_element_type=jnp.float32) + lb_ref[...])
    else:
        for b in range(n):
            hb = jnp.zeros((1, oc), jnp.float32)
            for y in range(oh):
                row = jnp.zeros((ow, oc), jnp.float32)
                for t, (i, j) in enumerate(taps):
                    lhs = x_ref[b, y + i, j:j + ow, :]                          # (OW, Cin)
                    row = row + jnp.dot(lhs, w_ref[t], preferred_element_type=jnp.float32)
                row = jnp.maximum(row + bias, 0.0)
                hb = hb + jnp.sum(row, axis=0, keepdims=True)
            o_ref[pl.ds(b, 1), :] = (
                jnp.dot(hb, lw_ref[...], preferred_element_type=jnp.float32) + lb_ref[...])


# ---------------------------------------------------------------------------
# pallas_call wrappers
# ---------------------------------------------------------------------------
def conv_layer(xp, w_packed, bias, *, oh, ow, taps, relu, out_dtype):
    n, ph, pw, cin = xp.shape
    ntaps, cin_w, ocp = w_packed.shape
    assert cin == cin_w and ntaps == len(taps)
    toc = 256 if ocp % 256 == 0 else 128      # 256-aligned OC tiles where possible (v6e/v7x MXU)
    assert ocp % toc == 0
    flat = (ow % 8 == 0)
    kernel = functools.partial(conv_tap_kernel, taps=tuple(taps), oh=oh, ow=ow,
                               relu=relu, flat=flat)
    return pl.pallas_call(
        kernel,
        out_shape=jax.ShapeDtypeStruct((n, oh, ow, ocp), out_dtype),
        grid_spec=pltpu.PrefetchScalarGridSpec(
            num_scalar_prefetch=0,
            grid=(n, ocp // toc),
            in_specs=[
                pl.BlockSpec((1, ph, pw, cin), lambda b, c: (b, 0, 0, 0)),
                pl.BlockSpec((ntaps, cin, toc), lambda b, c: (0, 0, c)),
                pl.BlockSpec((1, toc), lambda b, c: (0, c)),
            ],
            out_specs=pl.BlockSpec((1, oh, ow, toc), lambda b, c: (b, 0, 0, c)),
        ),
        compiler_params=pltpu.CompilerParams(
            dimension_semantics=("parallel", "parallel"),
            vmem_limit_bytes=32 * 1024 * 1024),
    )(xp, w_packed, bias)


def trunk_head_call(xp, w_packed, bias, lin_w, lin_b, *, oh, ow, taps):
    n = xp.shape[0]
    flat = (ow % 8 == 0)
    kernel = functools.partial(trunk_head_kernel, taps=tuple(taps), oh=oh, ow=ow, flat=flat)
    # Trunk activation is the smallest in the network: whole-array VMEM blocks are cheap
    # here and let us fuse the global sum + linear head (no HBM round-trip of the trunk).
    return pl.pallas_call(
        kernel,
        out_shape=jax.ShapeDtypeStruct((n, 1), jnp.float32),
        in_specs=[pl.BlockSpec(memory_space=pltpu.MemorySpace.VMEM)] * 5,
        out_specs=pl.BlockSpec(memory_space=pltpu.MemorySpace.VMEM),
        compiler_params=pltpu.CompilerParams(vmem_limit_bytes=32 * 1024 * 1024),
    )(xp, w_packed, bias, lin_w, lin_b)


# ---------------------------------------------------------------------------
# Wrapper-side layout prep (byte-neutral XLA glue: pad / space-to-depth / tiny im2col)
# ---------------------------------------------------------------------------
def pad_hw(x, p=1):
    return jnp.pad(x, ((0, 0), (p, p), (p, p), (0, 0)))


def space_to_depth2(x):
    n, h, w, c = x.shape                       # h, w even
    x = x.reshape(n, h // 2, 2, w // 2, 2, c)
    x = jnp.transpose(x, (0, 1, 3, 2, 4, 5))
    return x.reshape(n, h // 2, w // 2, 4 * c)


def im2col_3x3(x):                             # only used for the tiny 3-channel input
    xp = pad_hw(x)
    n, ph, pw, c = xp.shape
    oh, ow = ph - 2, pw - 2
    taps = [xp[:, i:i + oh, j:j + ow, :] for i in range(3) for j in range(3)]
    return jnp.concatenate(taps, axis=-1)      # channel order: (i*3 + j)*C + c


# ---------------------------------------------------------------------------
# Parameters: deterministic synthetic init (PyTorch OIHW layout) + one-time packing
# ---------------------------------------------------------------------------
def init_params(key):
    in_dims = [3, 64, 128]
    out_dims = [64, 128, 256]
    params = {"blocks": []}
    scale = 0.05

    def nrm(k, shape):
        return scale * jax.random.normal(k, shape, dtype=jnp.float32)

    keys = jax.random.split(key, 4 * len(in_dims) + 4)
    ki = 0
    for cin, cout in zip(in_dims, out_dims):
        w0 = nrm(keys[ki], (cout, cin, 3, 3)); ki += 1
        b0 = nrm(keys[ki], (cout,));           ki += 1
        w1 = nrm(keys[ki], (cout, cout, 4, 4)); ki += 1
        b1 = nrm(keys[ki], (cout,));           ki += 1
        params["blocks"].append((w0, b0, w1, b1))
    params["conv_w"] = nrm(keys[ki], (512, 256, 3, 3)); ki += 1
    params["conv_b"] = nrm(keys[ki], (512,));           ki += 1
    params["lin_w"] = nrm(keys[ki], (512, 1));          ki += 1   # stored (in, out)
    params["lin_b"] = nrm(keys[ki], (1,));              ki += 1
    return params


def _pack_bias(bias, oc_pad):
    return jnp.pad(bias, (0, oc_pad - bias.shape[0])).reshape(1, oc_pad).astype(jnp.float32)


def pack_conv3x3(w_oihw, bias, cin_pad, oc_pad, dtype):
    oc, ic, kh, kw = w_oihw.shape
    w = jnp.transpose(w_oihw, (2, 3, 1, 0))                               # (3,3,IC,OC)
    w = jnp.pad(w, ((0, 0), (0, 0), (0, cin_pad - ic), (0, oc_pad - oc)))
    w = w.reshape(kh * kw, cin_pad, oc_pad)                               # tap = i*3 + j
    taps = [(i, j) for i in range(3) for j in range(3)]
    return w.astype(dtype), _pack_bias(bias, oc_pad), taps


def pack_conv4x4_s2(w_oihw, bias, cin_pad, oc_pad, dtype):
    # 4x4 stride-2 pad-1 conv re-expressed as a 2x2 stride-1 conv over the
    # space-to-depth(2) padded input with 4*cin_pad channels.
    oc, ic, kh, kw = w_oihw.shape
    w = jnp.transpose(w_oihw, (2, 3, 1, 0))                               # (4,4,IC,OC)
    w = jnp.pad(w, ((0, 0), (0, 0), (0, cin_pad - ic), (0, oc_pad - oc)))
    w = w.reshape(2, 2, 2, 2, cin_pad, oc_pad)                            # (e,b,f,d,ICp,OCp)
    w = jnp.transpose(w, (0, 2, 1, 3, 4, 5))                              # (e,f,b,d,ICp,OCp)
    w = w.reshape(4, 4 * cin_pad, oc_pad)                                 # tap = e*2 + f
    taps = [(e, f) for e in range(2) for f in range(2)]
    return w.astype(dtype), _pack_bias(bias, oc_pad), taps


def pack_conv3x3_as_1x1(w_oihw, bias, k_pad, oc_pad, dtype):
    # First layer only: the 3-channel input is im2col'ed in the wrapper (tiny tensor),
    # making this a 1x1 conv with a lane-dense, padded K.
    oc, ic, kh, kw = w_oihw.shape
    w = jnp.transpose(w_oihw, (2, 3, 1, 0)).reshape(kh * kw * ic, oc)     # (27, 64)
    w = jnp.pad(w, ((0, k_pad - kh * kw * ic), (0, oc_pad - oc)))
    return w.reshape(1, k_pad, oc_pad).astype(dtype), _pack_bias(bias, oc_pad), [(0, 0)]


def pack_params(params, dtype):
    layers = []
    cin_pad = FIRST_K_PAD
    first = True
    for (w0, b0, w1, b1) in params["blocks"]:
        oc_pad = _round_up(w0.shape[0], LANE)
        if first:
            w, b, taps = pack_conv3x3_as_1x1(w0, b0, FIRST_K_PAD, oc_pad, dtype)
            layers.append(dict(prep="im2col3", w=w, b=b, taps=taps))
            first = False
        else:
            w, b, taps = pack_conv3x3(w0, b0, cin_pad, oc_pad, dtype)
            layers.append(dict(prep="pad1", w=w, b=b, taps=taps))
        w, b, taps = pack_conv4x4_s2(w1, b1, oc_pad, oc_pad, dtype)
        layers.append(dict(prep="s2d", w=w, b=b, taps=taps))
        cin_pad = oc_pad
    tw, tb, ttaps = pack_conv3x3(params["conv_w"], params["conv_b"], cin_pad,
                                 _round_up(512, LANE), dtype)
    return dict(dtype=dtype, layers=layers,
                trunk_w=tw, trunk_b=tb, trunk_taps=ttaps,
                lin_w=params["lin_w"].astype(jnp.float32),
                lin_b=params["lin_b"].reshape(1, 1).astype(jnp.float32))


# ---------------------------------------------------------------------------
# Full Discriminator forward (Pallas)
# ---------------------------------------------------------------------------
def discriminator_forward(x_nchw, label, packed):
    del label                                              # conditional_strategy == 'no'
    dt = packed["dtype"]
    h = jnp.transpose(x_nchw, (0, 2, 3, 1)).astype(dt)     # NCHW -> NHWC
    for layer in packed["layers"]:
        n, hh, ww, _ = h.shape
        if layer["prep"] == "s2d":                         # conv4x4 s2 p1 (+ ReLU)
            oh, ow = hh // 2, ww // 2
            xp = space_to_depth2(pad_hw(h))
        elif layer["prep"] == "pad1":                      # conv3x3 s1 p1 (+ ReLU)
            oh, ow = hh, ww
            xp = pad_hw(h)
        else:                                              # first layer (3-ch input)
            oh, ow = hh, ww
            xp = im2col_3x3(h)
            xp = jnp.pad(xp, ((0, 0), (0, 0), (0, 0),
                              (0, layer["w"].shape[1] - xp.shape[-1])))
        h = conv_layer(xp, layer["w"], layer["b"], oh=oh, ow=ow,
                       taps=layer["taps"], relu=True, out_dtype=dt)
    # trunk conv (256->512) + ReLU + global spatial sum + linear head, fused in one kernel
    xp = pad_hw(h)
    out = trunk_head_call(xp, packed["trunk_w"], packed["trunk_b"],
                          packed["lin_w"], packed["lin_b"],
                          oh=h.shape[1], ow=h.shape[2], taps=packed["trunk_taps"])
    return jnp.squeeze(out, axis=-1)                       # (N,)


# ---------------------------------------------------------------------------
# Pure-JAX reference (for correctness check)
# ---------------------------------------------------------------------------
def conv_ref(x_nhwc, w_oihw, b, stride, pad):
    w_hwio = jnp.transpose(w_oihw, (2, 3, 1, 0))
    y = lax.conv_general_dilated(
        x_nhwc, w_hwio, (stride, stride), ((pad, pad), (pad, pad)),
        dimension_numbers=("NHWC", "HWIO", "NHWC"),
        precision=lax.Precision.HIGHEST)
    return y + b


def discriminator_ref(x_nchw, params, act_dtype=jnp.float32):
    # act_dtype=bf16 mirrors the kernel's storage precision: conv math in f32,
    # activations and conv weights rounded to bf16 between layers.
    def q(a):
        return a.astype(act_dtype).astype(jnp.float32)

    h = q(jnp.transpose(x_nchw, (0, 2, 3, 1)).astype(jnp.float32))
    for (w0, b0, w1, b1) in params["blocks"]:
        h = q(jax.nn.relu(conv_ref(h, q(w0), b0, 1, 1)))
        h = q(jax.nn.relu(conv_ref(h, q(w1), b1, 2, 1)))
    h = jax.nn.relu(conv_ref(h, q(params["conv_w"]), params["conv_b"], 1, 1))
    h = jnp.sum(h, axis=(1, 2))
    out = jnp.dot(h, params["lin_w"], precision=lax.Precision.HIGHEST) + params["lin_b"]
    return jnp.squeeze(out, axis=-1)


# ---------------------------------------------------------------------------
if __name__ == "__main__":
    key = jax.random.PRNGKey(0)
    k_param, k_x, k_label = jax.random.split(key, 3)

    params = init_params(k_param)

    batch, img_size = 2, 16
    x = jax.random.normal(k_x, (batch, 3, img_size, img_size), dtype=jnp.float32)
    label = jax.random.randint(k_label, (batch,), 0, 10)   # unused ('no' strategy)

    # f32 path: exact module semantics.
    packed_f32 = pack_params(params, jnp.float32)
    out_f32 = jax.block_until_ready(discriminator_forward(x, label, packed_f32))
    ref_f32 = jax.block_until_ready(discriminator_ref(x, params, jnp.float32))
    assert out_f32.shape == (batch,), out_f32.shape
    assert jnp.allclose(out_f32, ref_f32, rtol=1e-3, atol=1e-3), (out_f32, ref_f32)

    # bf16 activations/weights with f32 accumulation + f32 epilogue (v6e/v7x recipe),
    # checked against a reference with the same inter-layer bf16 rounding.
    packed_bf16 = pack_params(params, jnp.bfloat16)
    out_bf16 = jax.block_until_ready(discriminator_forward(x, label, packed_bf16))
    ref_bf16 = jax.block_until_ready(discriminator_ref(x, params, jnp.bfloat16))
    assert out_bf16.shape == (batch,), out_bf16.shape
    assert jnp.allclose(out_bf16, ref_bf16, rtol=2e-2, atol=2e-2), (out_bf16, ref_bf16)

    print("KERNEL_OK")
</pallas_src>

<mosaic_0001>
module attributes {stable_mosaic.version = 11 : i64} {
  func.func @conv_tap_kernel(%arg0: i32, %arg1: i32, %arg2: memref<1x16x16x128xf32, #tpu.memory_space<vmem>>, %arg3: memref<1x128x128xf32, #tpu.memory_space<vmem>>, %arg4: memref<1x128xf32, #tpu.memory_space<vmem>>, %arg5: memref<1x16x16x128xf32, #tpu.memory_space<vmem>>) attributes {dimension_semantics = [#tpu.dimension_semantics<parallel>, #tpu.dimension_semantics<parallel>], iteration_bounds = array<i64: 2, 1>, scalar_prefetch = 0 : i64, scratch_operands = 0 : i64, tpu.core_type = #tpu.core_type<tc>, window_params = [{transform_indices = @transform_0, window_bounds = array<i64: 1, 16, 16, 128>}, {transform_indices = @transform_1, window_bounds = array<i64: 1, 128, 128>}, {transform_indices = @transform_2, window_bounds = array<i64: 1, 128>}, {transform_indices = @transform_3, window_bounds = array<i64: 1, 16, 16, 128>}]} {
    %c0 = arith.constant 0 : index
    %c0_0 = arith.constant 0 : index
    %0 = vector.load %arg4[%c0, %c0_0] : memref<1x128xf32, #tpu.memory_space<vmem>>, vector<1x128xf32>
    %cst = arith.constant 0.000000e+00 : f32
    %1 = vector.broadcast %cst : f32 to vector<256x128xf32>
    %c0_1 = arith.constant 0 : index
    %c0_2 = arith.constant 0 : index
    %c0_3 = arith.constant 0 : index
    %c0_4 = arith.constant 0 : index
    %2 = vector.load %arg2[%c0_1, %c0_2, %c0_3, %c0_4] : memref<1x16x16x128xf32, #tpu.memory_space<vmem>>, vector<1x16x16x128xf32>
    %3 = vector.shape_cast %2 : vector<1x16x16x128xf32> to vector<16x16x128xf32>
    %4 = vector.shape_cast %3 : vector<16x16x128xf32> to vector<256x128xf32>
    %c0_5 = arith.constant 0 : index
    %c0_6 = arith.constant 0 : index
    %c0_7 = arith.constant 0 : index
    %5 = vector.load %arg3[%c0_5, %c0_6, %c0_7] : memref<1x128x128xf32, #tpu.memory_space<vmem>>, vector<1x128x128xf32>
    %6 = vector.shape_cast %5 : vector<1x128x128xf32> to vector<128x128xf32>
    %cst_8 = arith.constant dense<0.000000e+00> : vector<256x128xf32>
    %7 = tpu.matmul %4, %6, %cst_8 {dimension_numbers = #tpu.dot_dimension_numbers<[1], [0], [0], [1], [0, 0, 1, 1], [], []>} : vector<256x128xf32>, vector<128x128xf32>, vector<256x128xf32> -> vector<256x128xf32>
    %8 = arith.addf %1, %7 : vector<256x128xf32>
    %9 = vector.broadcast %0 : vector<1x128xf32> to vector<256x128xf32>
    %10 = arith.addf %8, %9 : vector<256x128xf32>
    %cst_9 = arith.constant 0.000000e+00 : f32
    %11 = vector.broadcast %cst_9 : f32 to vector<256x128xf32>
    %12 = arith.maximumf %10, %11 : vector<256x128xf32>
    %13 = vector.shape_cast %12 : vector<256x128xf32> to vector<1x16x16x128xf32>
    %c0_10 = arith.constant 0 : index
    %c0_11 = arith.constant 0 : index
    %c0_12 = arith.constant 0 : index
    %c0_13 = arith.constant 0 : index
    %14 = vector.load %arg5[%c0_10, %c0_11, %c0_12, %c0_13] : memref<1x16x16x128xf32, #tpu.memory_space<vmem>>, vector<1x16x16x128xf32>
    tpu.vector_store %arg5[%c0_10, %c0_11, %c0_12, %c0_13], %13 {strides = array<i32>} : memref<1x16x16x128xf32, #tpu.memory_space<vmem>>, vector<1x16x16x128xf32>,
    return
  }
  func.func @transform_0(%arg0: i32, %arg1: i32) -> (i32, i32, i32, i32) {
    %c0_i32 = arith.constant 0 : i32
    %c0_i32_0 = arith.constant 0 : i32
    %c0_i32_1 = arith.constant 0 : i32
    %c0_i32_2 = arith.constant 0 : i32
    return %arg0, %c0_i32, %c0_i32_0, %c0_i32_1 : i32, i32, i32, i32
  }
  func.func @transform_1(%arg0: i32, %arg1: i32) -> (i32, i32, i32) {
    %c0_i32 = arith.constant 0 : i32
    %c0_i32_0 = arith.constant 0 : i32
    %c0_i32_1 = arith.constant 0 : i32
    return %c0_i32, %c0_i32_0, %arg1 : i32, i32, i32
  }
  func.func @transform_2(%arg0: i32, %arg1: i32) -> (i32, i32) {
    %c0_i32 = arith.constant 0 : i32
    %c0_i32_0 = arith.constant 0 : i32
    return %c0_i32, %arg1 : i32, i32
  }
  func.func @transform_3(%arg0: i32, %arg1: i32) -> (i32, i32, i32, i32) {
    %c0_i32 = arith.constant 0 : i32
    %c0_i32_0 = arith.constant 0 : i32
    %c0_i32_1 = arith.constant 0 : i32
    return %arg0, %c0_i32, %c0_i32_0, %arg1 : i32, i32, i32, i32
  }
}

</mosaic_0001>

<llo_original>
// kernel: tpu_custom_call.1
$region0: #{tpu_custom_call.1}
  #allocation0 [shape = 'u32[]', space=smem, size = 0x4, offset = 0x4, fixed_abs, tag = 'smem constant byte address 0x4 - core index']
  #allocation1 [shape = 'u32[72,128]{1,0:T(1,128)}', space=vmem, size = 0x9000, scoped, tag = 'internal scratch']
  %s0 = inlined_call_operand.hbm [shape: f32[2,16,16,128], index: 0, kind: input, shape index: {}]
  %s1 = inlined_call_operand.hbm [shape: f32[1,128,128], index: 1, kind: input, shape index: {}]
  %s2 = inlined_call_operand.vmem [shape: f32[1,128], index: 2, kind: input, shape index: {}]
  %s3 = inlined_call_operand.hbm [shape: f32[2,16,16,128], index: 3, kind: output, shape index: {}]
  %s4 = sld [smem:[#allocation0]]
  $region53: #{tpu_custom_call.1} parent=0
    _
  %s6 = ssub.s32 1, %s4
  %s7 = scalar_select 0, %s6, %s4
  $region1: #{tpu_custom_call.1} parent=0
    #allocation2 [shape = 'u8[262144]{0}', space=vmem, size = 0x40000, scoped, tag = 'input window, operand 0']
    #allocation3 [shape = 's32[2]{0}', space=sflag, size = 0x8, scoped, tag = 'scoped memory for tpu_custom_call.1']
    #allocation4 [shape = 's32[2]{0}', space=sflag, size = 0x8, scoped, tag = 'scoped memory for tpu_custom_call.1']
    #allocation5 [shape = 'u8[65536]{0}', space=vmem, size = 0x10000, scoped, tag = 'input window, operand 1, single buffered']
    #allocation6 [shape = 's32[1]{0}', space=sflag, size = 0x4, scoped, tag = 'scoped memory for tpu_custom_call.1']
    #allocation7 [shape = 'u8[262144]{0}', space=vmem, size = 0x40000, scoped, tag = 'output window, operand 0']
    %8 = vsyncpa [#allocation3], 0
    %s9 = scalar_lea.sflag [#allocation3], 1
    %10 = vsyncpa %s9, 0
    %11 = vsyncpa [#allocation6], 0
    %12 = vsyncpa [#allocation4], 0
    %s13 = scalar_lea.sflag [#allocation4], 1
    %14 = vsyncpa %s13, 0
    loop: start=0, step=1, limit=4
    $region2: #{tpu_custom_call.1} parent=1 // loop_pre_header
      _
    $region3: #{tpu_custom_call.1} parent=1 // loop_header
      %s16 = sphi 0, %s20
      %p17 = scmp.ge.s32.totalorder %s16, 4
      %s23 = sphi 0, %s35
      %s24 = sphi 0, %s31
      %s25 = sphi 0, %s23
      %s26 = sphi 0, %s24
      %s27 = sphi 0, %s25
      %s28 = sphi 0, %s26
      %s38 = sphi 0, %s40
      %s41 = sphi 0, %s38
      %s42 = sphi 0, %s41
      %s58 = sphi 0, %s42
      %s64 = sphi 0, %s66
      %s67 = sphi 0, %s64
      %s68 = sphi 0, %s67
      %s84 = sphi 0, %s68
      %s90 = sphi 0, %s92
      %s93 = sphi 0, %s90
      %s94 = sphi 0, %s93
      %s110 = sphi 0, %s94
      %s118 = sphi 0, %s120
      %s121 = sphi 0, %s118
      %s122 = sphi 0, %s121
      %s138 = sphi 0, %s122
    $region4: #{tpu_custom_call.1} parent=1 // loop_header_branch
      %19 = sbr.rel (%p17) target = $region8
    $region5: #{tpu_custom_call.1} parent=1 // loop_body
      %s21 = ssub.s32 %s16, 1
      %s22 = ssub.s32 %s16, 2
      %s29 = sadd.s32 1, %s24
      %p30 = scmp.ge.s32.totalorder %s29, 1
      %s31 = scalar_select %p30, 0, %s29
      %s32 = sadd.s32 1, %s23
      %s33 = scalar_select %p30, %s32, %s23
      %p34 = scmp.ge.s32.totalorder %s33, 2
      %s35 = scalar_select %p34, 0, %s33
      %s36 = ssub.s32 %s23, %s35
      %p37 = scmp.eq.s32.totalorder %s36, 0
      %s39 = sadd.s32 %s38, 1
      %s40 = scalar_select %p37, %s38, %s39
      %p43 = pneg %p37
      %p44 = scmp.eq.s32.totalorder %s16, 1
      %p45 = por %p43, %p44
      %p46 = scmp.ne.s32.totalorder %s38, %s41
      %p47 = scmp.eq.s32.totalorder %s16, 0
      %p48 = por %p46, %p47
      %p49 = scmp.ne.s32.totalorder %s38, %s41
      %p50 = scmp.eq.s32.totalorder %s21, 1
      %p51 = por %p49, %p50
      %p52 = scmp.ne.s32.totalorder %s41, %s42
      %p53 = scmp.eq.s32.totalorder %s21, 0
      %p54 = por %p52, %p53
      %p55 = scmp.ne.s32.totalorder %s41, %s42
      %p56 = scmp.eq.s32.totalorder %s22, 1
      %p57 = por %p55, %p56
      %p59 = scmp.ne.s32.totalorder %s42, %s58
      %p60 = scmp.eq.s32.totalorder %s22, 0
      %p61 = por %p59, %p60
      %s62 = ssub.s32 %s24, %s31
      %p63 = scmp.eq.s32.totalorder %s62, 0
      %s65 = sadd.s32 %s64, 1
      %s66 = scalar_select %p63, %s64, %s65
      %p69 = pneg %p63
      %p70 = scmp.eq.s32.totalorder %s16, 1
      %p71 = por %p69, %p70
      %p72 = scmp.ne.s32.totalorder %s64, %s67
      %p73 = scmp.eq.s32.totalorder %s16, 0
      %p74 = por %p72, %p73
      %p75 = scmp.ne.s32.totalorder %s64, %s67
      %p76 = scmp.eq.s32.totalorder %s21, 1
      %p77 = por %p75, %p76
      %p78 = scmp.ne.s32.totalorder %s67, %s68
      %p79 = scmp.eq.s32.totalorder %s21, 0
      %p80 = por %p78, %p79
      %p81 = scmp.ne.s32.totalorder %s67, %s68
      %p82 = scmp.eq.s32.totalorder %s22, 1
      %p83 = por %p81, %p82
      %p85 = scmp.ne.s32.totalorder %s68, %s84
      %p86 = scmp.eq.s32.totalorder %s22, 0
      %p87 = por %p85, %p86
      %s88 = ssub.s32 %s24, %s31
      %p89 = scmp.eq.s32.totalorder %s88, 0
      %s91 = sadd.s32 %s90, 1
      %s92 = scalar_select %p89, %s90, %s91
      %p95 = pneg %p89
      %p96 = scmp.eq.s32.totalorder %s16, 1
      %p97 = por %p95, %p96
      %p98 = scmp.ne.s32.totalorder %s90, %s93
      %p99 = scmp.eq.s32.totalorder %s16, 0
      %p100 = por %p98, %p99
      %p101 = scmp.ne.s32.totalorder %s90, %s93
      %p102 = scmp.eq.s32.totalorder %s21, 1
      %p103 = por %p101, %p102
      %p104 = scmp.ne.s32.totalorder %s93, %s94
      %p105 = scmp.eq.s32.totalorder %s21, 0
      %p106 = por %p104, %p105
      %p107 = scmp.ne.s32.totalorder %s93, %s94
      %p108 = scmp.eq.s32.totalorder %s22, 1
      %p109 = por %p107, %p108
      %p111 = scmp.ne.s32.totalorder %s94, %s110
      %p112 = scmp.eq.s32.totalorder %s22, 0
      %p113 = por %p111, %p112
      %s114 = ssub.s32 %s23, %s35
      %s115 = ssub.s32 %s24, %s31
      %s116 = sor.u32 %s114, %s115
      %p117 = scmp.eq.s32.totalorder %s116, 0
      %s119 = sadd.s32 %s118, 1
      %s120 = scalar_select %p117, %s118, %s119
      %p123 = pneg %p117
      %p124 = scmp.eq.s32.totalorder %s16, 1
      %p125 = por %p123, %p124
      %p126 = scmp.ne.s32.totalorder %s118, %s121
      %p127 = scmp.eq.s32.totalorder %s16, 0
      %p128 = por %p126, %p127
      %p129 = scmp.ne.s32.totalorder %s118, %s121
      %p130 = scmp.eq.s32.totalorder %s21, 1
      %p131 = por %p129, %p130
      %p132 = scmp.ne.s32.totalorder %s121, %s122
      %p133 = scmp.eq.s32.totalorder %s21, 0
      %p134 = por %p132, %p133
      %p135 = scmp.ne.s32.totalorder %s121, %s122
      %p136 = scmp.eq.s32.totalorder %s22, 1
      %p137 = por %p135, %p136
      %p139 = scmp.ne.s32.totalorder %s122, %s138
      %p140 = scmp.eq.s32.totalorder %s22, 0
      %p141 = por %p139, %p140
      %p142 = scmp.le.s32.totalorder 1, %s16
      %p143 = scmp.lt.s32.totalorder %s16, 3
      %p144 = pnand %p142, %p143
      %p145 = pneg %p144
      // Predicated region
      $region9: #{tpu_custom_call.1} parent=5 // pred_check
        _
      $region10: #{tpu_custom_call.1} parent=5 // pred_check_branch
        %147 = sbr.rel (%p144) target = $region12
      $region11: #{tpu_custom_call.1} parent=5 // pred_region
        %s148 = ssub.s32 %s16, 1
        // Predicated region
        $region13: #{tpu_custom_call.1} parent=11 // pred_check
          %p149 = pneg %p80
        $region14: #{tpu_custom_call.1} parent=11 // pred_check_branch
          %151 = sbr.rel (%p149) target = $region16
        $region15: #{tpu_custom_call.1} parent=11 // pred_region
          %153 = vsyncadd [#allocation6], 0
          %s154 = smul.addr %s26, 8
          %s155 = scalar_lea.hbm %s1, %s154
          %s156 = sshll.u32 %s155, 4
          %s157 = int_to_ptr.hbm [resolvable:$true] %s156
          %s158 = sshll.u32 [#allocation5], 4
          %s159 = int_to_ptr.vmem [resolvable:$true] %s158
          %164 = dma.hbm_to_vmem [thread:$0]  %s157, 2048, %s159, [#allocation6], 128, 128, 8
        $region16: #{tpu_custom_call.1} parent=11 // pred_fallthru
          _
        // Predicated region
        $region17: #{tpu_custom_call.1} parent=11 // pred_check
          %p165 = pneg %p106
        $region18: #{tpu_custom_call.1} parent=11 // pred_check_branch
          %167 = sbr.rel (%p165) target = $region20
        $region19: #{tpu_custom_call.1} parent=11 // pred_region
          %p168 = scmp.lt.s32.totalorder %s26, 0
          %s169 = scalar_select %p168, %s26, 0
          %s170 = scalar_lea.vmem %s2, %s169
        $region20: #{tpu_custom_call.1} parent=11 // pred_fallthru
          _
      $region12: #{tpu_custom_call.1} parent=5 // pred_fallthru
        _
      %p171 = scmp.lt.s32.totalorder %s16, 2
      // Predicated region
      $region21: #{tpu_custom_call.1} parent=5 // pred_check
        %p172 = pneg %p171
      $region22: #{tpu_custom_call.1} parent=5 // pred_check_branch
        %174 = sbr.rel (%p172) target = $region24
      $region23: #{tpu_custom_call.1} parent=5 // pred_region
        // Predicated region
        $region25: #{tpu_custom_call.1} parent=23 // pred_check
          %p175 = pneg %p48
        $region26: #{tpu_custom_call.1} parent=23 // pred_check_branch
          %177 = sbr.rel (%p175) target = $region28
        $region27: #{tpu_custom_call.1} parent=23 // pred_region
          %s178 = sand.u32 %s38, 1
          %s179 = scalar_lea.sflag [#allocation3], %s178
          %s180 = sand.u32 %s38, 1
          %s181 = smul.addr %s180, 256
          %s182 = scalar_lea.vmem [#allocation2], %s181
          %184 = vsyncadd %s179, 0
          %s185 = smul.addr %s23, 32
          %s186 = smul.addr %s185, 8
          %s187 = scalar_lea.hbm %s0, %s186
          %s188 = sshll.u32 %s187, 4
          %s189 = int_to_ptr.hbm [resolvable:$true] %s188
          %s190 = sshll.u32 %s182, 4
          %s191 = int_to_ptr.vmem [resolvable:$true] %s190
          %196 = dma.hbm_to_vmem [thread:$0]  %s189, 4096, %s191, %s179, 128, 128, 8
        $region28: #{tpu_custom_call.1} parent=23 // pred_fallthru
          _
      $region24: #{tpu_custom_call.1} parent=5 // pred_fallthru
        _
      %p197 = scmp.le.s32.totalorder 1, %s16
      %p198 = scmp.lt.s32.totalorder %s16, 3
      %p199 = pnand %p197, %p198
      %p200 = pneg %p199
      // Predicated region
      $region29: #{tpu_custom_call.1} parent=5 // pred_check
        _
      $region30: #{tpu_custom_call.1} parent=5 // pred_check_branch
        %202 = sbr.rel (%p199) target = $region32
      $region31: #{tpu_custom_call.1} parent=5 // pred_region
        %s203 = ssub.s32 %s16, 1
        %s204 = sand.u32 %s41, 1
        %s205 = scalar_lea.sflag [#allocation3], %s204
        %s206 = sand.u32 %s41, 1
        %s207 = smul.addr %s206, 256
        %s208 = scalar_lea.vmem [#allocation2], %s207
        // Predicated region
        $region33: #{tpu_custom_call.1} parent=31 // pred_check
          %p209 = pneg %p54
        $region34: #{tpu_custom_call.1} parent=31 // pred_check_branch
          %211 = sbr.rel (%p209) target = $region36
        $region35: #{tpu_custom_call.1} parent=31 // pred_region
          %213 = dma.done %s205, 4096
        $region36: #{tpu_custom_call.1} parent=31 // pred_fallthru
          _
        // Predicated region
        $region37: #{tpu_custom_call.1} parent=31 // pred_check
          %p214 = pneg %p80
        $region38: #{tpu_custom_call.1} parent=31 // pred_check_branch
          %216 = sbr.rel (%p214) target = $region40
        $region39: #{tpu_custom_call.1} parent=31 // pred_region
          %218 = dma.done [#allocation6], 2048
        $region40: #{tpu_custom_call.1} parent=31 // pred_fallthru
          _
        %s219 = sand.u32 %s41, 1
        %s220 = scalar_lea.sflag [#allocation3], %s219
        %s221 = sand.u32 %s41, 1
        %s222 = smul.addr %s221, 256
        %s223 = scalar_lea.vmem [#allocation2], %s222
        %p224 = pneg %p54
        %p225 = pneg %p51
        %p226 = pneg %p80
        %p227 = pneg %p77
        %p228 = scmp.lt.s32.totalorder %s26, 0
        %s229 = scalar_select %p228, %s26, 0
        %s230 = scalar_lea.vmem %s2, %s229
        %p231 = pneg %p106
        %p232 = pneg %p103
        %p233 = pneg %p134
        %p234 = pneg %p131
        %s235 = sand.u32 %s121, 1
        %s236 = scalar_lea.sflag [#allocation4], %s235
        %s237 = sand.u32 %s121, 1
        %s238 = smul.addr %s237, 256
        %s239 = scalar_lea.vmem [#allocation7], %s238
        %p240 = scmp.lt.s32.totalorder %s26, 0
        %s241 = scalar_select %p240, %s26, 0
        %s242 = scalar_lea.vmem %s2, %s241
        %v243 = vld [vmem:[%s242] sm:$0x1]
        %v244 = vld [vmem:[%s208] sm:$0xff]
        %v245 = vld [vmem:[%s208 + $0x8] sm:$0xff]
        %v246 = vld [vmem:[%s208 + $0x10] sm:$0xff]
        %v247 = vld [vmem:[%s208 + $0x18] sm:$0xff]
        %v248 = vld [vmem:[%s208 + $0x20] sm:$0xff]
        %v249 = vld [vmem:[%s208 + $0x28] sm:$0xff]
        %v250 = vld [vmem:[%s208 + $0x30] sm:$0xff]
        %v251 = vld [vmem:[%s208 + $0x38] sm:$0xff]
        %v252 = vld [vmem:[%s208 + $0x40] sm:$0xff]
        %v253 = vld [vmem:[%s208 + $0x48] sm:$0xff]
        %v254 = vld [vmem:[%s208 + $0x50] sm:$0xff]
        %v255 = vld [vmem:[%s208 + $0x58] sm:$0xff]
        %v256 = vld [vmem:[%s208 + $0x60] sm:$0xff]
        %v257 = vld [vmem:[%s208 + $0x68] sm:$0xff]
        %v258 = vld [vmem:[%s208 + $0x70] sm:$0xff]
        %v259 = vld [vmem:[%s208 + $0x78] sm:$0xff]
        %v260 = vld [vmem:[%s208 + $0x80] sm:$0xff]
        %v261 = vld [vmem:[%s208 + $0x88] sm:$0xff]
        %v262 = vld [vmem:[%s208 + $0x90] sm:$0xff]
        %v263 = vld [vmem:[%s208 + $0x98] sm:$0xff]
        %v264 = vld [vmem:[%s208 + $0xa0] sm:$0xff]
        %v265 = vld [vmem:[%s208 + $0xa8] sm:$0xff]
        %v266 = vld [vmem:[%s208 + $0xb0] sm:$0xff]
        %v267 = vld [vmem:[%s208 + $0xb8] sm:$0xff]
        %v268 = vld [vmem:[%s208 + $0xc0] sm:$0xff]
        %v269 = vld [vmem:[%s208 + $0xc8] sm:$0xff]
        %v270 = vld [vmem:[%s208 + $0xd0] sm:$0xff]
        %v271 = vld [vmem:[%s208 + $0xd8] sm:$0xff]
        %v272 = vld [vmem:[%s208 + $0xe0] sm:$0xff]
        %v273 = vld [vmem:[%s208 + $0xe8] sm:$0xff]
        %v274 = vld [vmem:[%s208 + $0xf0] sm:$0xff]
        %v275 = vld [vmem:[%s208 + $0xf8] sm:$0xff]
        %v276 = vld [vmem:[#allocation5] sm:$0xff]
        %v277 = vld [vmem:[#allocation5 + $0x8] sm:$0xff]
        %v278 = vld [vmem:[#allocation5 + $0x10] sm:$0xff]
        %v279 = vld [vmem:[#allocation5 + $0x18] sm:$0xff]
        %v280 = vld [vmem:[#allocation5 + $0x20] sm:$0xff]
        %v281 = vld [vmem:[#allocation5 + $0x28] sm:$0xff]
        %v282 = vld [vmem:[#allocation5 + $0x30] sm:$0xff]
        %v283 = vld [vmem:[#allocation5 + $0x38] sm:$0xff]
        %v284 = vld [vmem:[#allocation5 + $0x40] sm:$0xff]
        %v285 = vld [vmem:[#allocation5 + $0x48] sm:$0xff]
        %v286 = vld [vmem:[#allocation5 + $0x50] sm:$0xff]
        %v287 = vld [vmem:[#allocation5 + $0x58] sm:$0xff]
        %v288 = vld [vmem:[#allocation5 + $0x60] sm:$0xff]
        %v289 = vld [vmem:[#allocation5 + $0x68] sm:$0xff]
        %v290 = vld [vmem:[#allocation5 + $0x70] sm:$0xff]
        %v291 = vld [vmem:[#allocation5 + $0x78] sm:$0xff]
        %v293 = vperm.slane %v243, 0
        %295 = vmatpush.msra.mxu0 %v291
        %296 = vmatpush.msra.mxu0 %v290
        %297 = vmatpush.msra.mxu0 %v289
        %298 = vmatpush.msra.mxu0 %v288
        %299 = vmatpush.msra.mxu0 %v287
        %300 = vmatpush.msra.mxu0 %v286
        %301 = vmatpush.msra.mxu0 %v285
        %302 = vmatpush.msra.mxu0 %v284
        %303 = vmatpush.msra.mxu0 %v283
        %304 = vmatpush.msra.mxu0 %v282
        %305 = vmatpush.msra.mxu0 %v281
        %306 = vmatpush.msra.mxu0 %v280
        %307 = vmatpush.msra.mxu0 %v279
        %308 = vmatpush.msra.mxu0 %v278
        %309 = vmatpush.msra.mxu0 %v277
        %310 = vmatpush.msra.mxu0 %v276
        %311 = vmatmul.f32.gmra.mxu0 %v244
        %v312 = vpop.f32.mrf.mxu0
        %v313 = vadd.f32 %v293, %v312
        %314 = vmatmul.f32.gmra.mxu0 %v245
        %v315 = vpop.f32.mrf.mxu0
        %v316 = vadd.f32 %v293, %v315
        %317 = vmatmul.f32.gmra.mxu0 %v246
        %v318 = vpop.f32.mrf.mxu0
        %v319 = vadd.f32 %v293, %v318
        %320 = vmatmul.f32.gmra.mxu0 %v247
        %v321 = vpop.f32.mrf.mxu0
        %v322 = vadd.f32 %v293, %v321
        %323 = vmatmul.f32.gmra.mxu0 %v248
        %v324 = vpop.f32.mrf.mxu0
        %v325 = vadd.f32 %v293, %v324
        %326 = vmatmul.f32.gmra.mxu0 %v249
        %v327 = vpop.f32.mrf.mxu0
        %v328 = vadd.f32 %v293, %v327
        %329 = vmatmul.f32.gmra.mxu0 %v250
        %v330 = vpop.f32.mrf.mxu0
        %v331 = vadd.f32 %v293, %v330
        %332 = vmatmul.f32.gmra.mxu0 %v251
        %v333 = vpop.f32.mrf.mxu0
        %v334 = vadd.f32 %v293, %v333
        %335 = vmatmul.f32.gmra.mxu0 %v252
        %v336 = vpop.f32.mrf.mxu0
        %v337 = vadd.f32 %v293, %v336
        %338 = vmatmul.f32.gmra.mxu0 %v253
        %v339 = vpop.f32.mrf.mxu0
        %v340 = vadd.f32 %v293, %v339
        %341 = vmatmul.f32.gmra.mxu0 %v254
        %v342 = vpop.f32.mrf.mxu0
        %v343 = vadd.f32 %v293, %v342
        %344 = vmatmul.f32.gmra.mxu0 %v255
        %v345 = vpop.f32.mrf.mxu0
        %v346 = vadd.f32 %v293, %v345
        %347 = vmatmul.f32.gmra.mxu0 %v256
        %v348 = vpop.f32.mrf.mxu0
        %v349 = vadd.f32 %v293, %v348
        %350 = vmatmul.f32.gmra.mxu0 %v257
        %v351 = vpop.f32.mrf.mxu0
        %v352 = vadd.f32 %v293, %v351
        %353 = vmatmul.f32.gmra.mxu0 %v258
        %v354 = vpop.f32.mrf.mxu0
        %v355 = vadd.f32 %v293, %v354
        %356 = vmatmul.f32.gmra.mxu0 %v259
        %v357 = vpop.f32.mrf.mxu0
        %v358 = vadd.f32 %v293, %v357
        %359 = vmatmul.f32.gmra.mxu0 %v260
        %v360 = vpop.f32.mrf.mxu0
        %v361 = vadd.f32 %v293, %v360
        %362 = vmatmul.f32.gmra.mxu0 %v261
        %v363 = vpop.f32.mrf.mxu0
        %v364 = vadd.f32 %v293, %v363
        %365 = vmatmul.f32.gmra.mxu0 %v262
        %v366 = vpop.f32.mrf.mxu0
        %v367 = vadd.f32 %v293, %v366
        %368 = vmatmul.f32.gmra.mxu0 %v263
        %v369 = vpop.f32.mrf.mxu0
        %v370 = vadd.f32 %v293, %v369
        %371 = vmatmul.f32.gmra.mxu0 %v264
        %v372 = vpop.f32.mrf.mxu0
        %v373 = vadd.f32 %v293, %v372
        %374 = vmatmul.f32.gmra.mxu0 %v265
        %v375 = vpop.f32.mrf.mxu0
        %v376 = vadd.f32 %v293, %v375
        %377 = vmatmul.f32.gmra.mxu0 %v266
        %v378 = vpop.f32.mrf.mxu0
        %v379 = vadd.f32 %v293, %v378
        %380 = vmatmul.f32.gmra.mxu0 %v267
        %v381 = vpop.f32.mrf.mxu0
        %v382 = vadd.f32 %v293, %v381
        %383 = vmatmul.f32.gmra.mxu0 %v268
        %v384 = vpop.f32.mrf.mxu0
        %v385 = vadd.f32 %v293, %v384
        %386 = vmatmul.f32.gmra.mxu0 %v269
        %v387 = vpop.f32.mrf.mxu0
        %v388 = vadd.f32 %v293, %v387
        %389 = vmatmul.f32.gmra.mxu0 %v270
        %v390 = vpop.f32.mrf.mxu0
        %v391 = vadd.f32 %v293, %v390
        %392 = vmatmul.f32.gmra.mxu0 %v271
        %v393 = vpop.f32.mrf.mxu0
        %v394 = vadd.f32 %v293, %v393
        %395 = vmatmul.f32.gmra.mxu0 %v272
        %v396 = vpop.f32.mrf.mxu0
        %v397 = vadd.f32 %v293, %v396
        %398 = vmatmul.f32.gmra.mxu0 %v273
        %v399 = vpop.f32.mrf.mxu0
        %v400 = vadd.f32 %v293, %v399
        %401 = vmatmul.f32.gmra.mxu0 %v274
        %v402 = vpop.f32.mrf.mxu0
        %v403 = vadd.f32 %v293, %v402
        %404 = vmatmul.f32.gmra.mxu0 %v275
        %v405 = vpop.f32.mrf.mxu0
        %v406 = vadd.f32 %v293, %v405
        %407 = vdwg.mxu0
        %v408 = vmax.f32 %v313, 0.0
        %v409 = vmax.f32 %v316, 0.0
        %v410 = vmax.f32 %v319, 0.0
        %v411 = vmax.f32 %v322, 0.0
        %v412 = vmax.f32 %v325, 0.0
        %v413 = vmax.f32 %v328, 0.0
        %v414 = vmax.f32 %v331, 0.0
        %v415 = vmax.f32 %v334, 0.0
        %v416 = vmax.f32 %v337, 0.0
        %v417 = vmax.f32 %v340, 0.0
        %v418 = vmax.f32 %v343, 0.0
        %v419 = vmax.f32 %v346, 0.0
        %v420 = vmax.f32 %v349, 0.0
        %v421 = vmax.f32 %v352, 0.0
        %v422 = vmax.f32 %v355, 0.0
        %v423 = vmax.f32 %v358, 0.0
        %v424 = vmax.f32 %v361, 0.0
        %v425 = vmax.f32 %v364, 0.0
        %v426 = vmax.f32 %v367, 0.0
        %v427 = vmax.f32 %v370, 0.0
        %v428 = vmax.f32 %v373, 0.0
        %v429 = vmax.f32 %v376, 0.0
        %v430 = vmax.f32 %v379, 0.0
        %v431 = vmax.f32 %v382, 0.0
        %v432 = vmax.f32 %v385, 0.0
        %v433 = vmax.f32 %v388, 0.0
        %v434 = vmax.f32 %v391, 0.0
        %v435 = vmax.f32 %v394, 0.0
        %v436 = vmax.f32 %v397, 0.0
        %v437 = vmax.f32 %v400, 0.0
        %v438 = vmax.f32 %v403, 0.0
        %v439 = vmax.f32 %v406, 0.0
        %440 = vst [vmem:[%s239] sm:$0xff] %v408
        %441 = vst [vmem:[%s239 + $0x8] sm:$0xff] %v409
        %442 = vst [vmem:[%s239 + $0x10] sm:$0xff] %v410
        %443 = vst [vmem:[%s239 + $0x18] sm:$0xff] %v411
        %444 = vst [vmem:[%s239 + $0x20] sm:$0xff] %v412
        %445 = vst [vmem:[%s239 + $0x28] sm:$0xff] %v413
        %446 = vst [vmem:[%s239 + $0x30] sm:$0xff] %v414
        %447 = vst [vmem:[%s239 + $0x38] sm:$0xff] %v415
        %448 = vst [vmem:[%s239 + $0x40] sm:$0xff] %v416
        %449 = vst [vmem:[%s239 + $0x48] sm:$0xff] %v417
        %450 = vst [vmem:[%s239 + $0x50] sm:$0xff] %v418
        %451 = vst [vmem:[%s239 + $0x58] sm:$0xff] %v419
        %452 = vst [vmem:[%s239 + $0x60] sm:$0xff] %v420
        %453 = vst [vmem:[%s239 + $0x68] sm:$0xff] %v421
        %454 = vst [vmem:[%s239 + $0x70] sm:$0xff] %v422
        %455 = vst [vmem:[%s239 + $0x78] sm:$0xff] %v423
        %456 = vst [vmem:[%s239 + $0x80] sm:$0xff] %v424
        %457 = vst [vmem:[%s239 + $0x88] sm:$0xff] %v425
        %458 = vst [vmem:[%s239 + $0x90] sm:$0xff] %v426
        %459 = vst [vmem:[%s239 + $0x98] sm:$0xff] %v427
        %460 = vst [vmem:[%s239 + $0xa0] sm:$0xff] %v428
        %461 = vst [vmem:[%s239 + $0xa8] sm:$0xff] %v429
        %462 = vst [vmem:[%s239 + $0xb0] sm:$0xff] %v430
        %463 = vst [vmem:[%s239 + $0xb8] sm:$0xff] %v431
        %464 = vst [vmem:[%s239 + $0xc0] sm:$0xff] %v432
        %465 = vst [vmem:[%s239 + $0xc8] sm:$0xff] %v433
        %466 = vst [vmem:[%s239 + $0xd0] sm:$0xff] %v434
        %467 = vst [vmem:[%s239 + $0xd8] sm:$0xff] %v435
        %468 = vst [vmem:[%s239 + $0xe0] sm:$0xff] %v436
        %469 = vst [vmem:[%s239 + $0xe8] sm:$0xff] %v437
        %470 = vst [vmem:[%s239 + $0xf0] sm:$0xff] %v438
        %471 = vst [vmem:[%s239 + $0xf8] sm:$0xff] %v439
        %s472 = sand.u32 %s121, 1
        %s473 = scalar_lea.sflag [#allocation4], %s472
        %s474 = sand.u32 %s121, 1
        %s475 = smul.addr %s474, 256
        %s476 = scalar_lea.vmem [#allocation7], %s475
        // Predicated region
        $region41: #{tpu_custom_call.1} parent=31 // pred_check
          %p477 = pneg %p131
        $region42: #{tpu_custom_call.1} parent=31 // pred_check_branch
          %479 = sbr.rel (%p477) target = $region44
        $region43: #{tpu_custom_call.1} parent=31 // pred_region
          %481 = vsyncadd %s473, 0
          %s482 = smul.addr %s25, 32
          %s483 = sadd.s32 %s26, %s482
          %s484 = smul.addr %s483, 8
          %s485 = scalar_lea.hbm %s3, %s484
          %s486 = sshll.u32 %s476, 4
          %s487 = int_to_ptr.vmem [resolvable:$true] %s486
          %s488 = sshll.u32 %s485, 4
          %s489 = int_to_ptr.hbm [resolvable:$true] %s488
          %494 = dma.vmem_to_hbm [thread:$0]  %s487, 4096, %s489, %s473, 128, 128, 8
        $region44: #{tpu_custom_call.1} parent=31 // pred_fallthru
          _
      $region32: #{tpu_custom_call.1} parent=5 // pred_fallthru
        _
      %p495 = scmp.le.s32.totalorder 2, %s16
      // Predicated region
      $region45: #{tpu_custom_call.1} parent=5 // pred_check
        %p496 = pneg %p495
      $region46: #{tpu_custom_call.1} parent=5 // pred_check_branch
        %498 = sbr.rel (%p496) target = $region48
      $region47: #{tpu_custom_call.1} parent=5 // pred_region
        %s499 = ssub.s32 %s16, 2
        // Predicated region
        $region49: #{tpu_custom_call.1} parent=47 // pred_check
          %p500 = pneg %p137
        $region50: #{tpu_custom_call.1} parent=47 // pred_check_branch
          %502 = sbr.rel (%p500) target = $region52
        $region51: #{tpu_custom_call.1} parent=47 // pred_region
          %s503 = sand.u32 %s122, 1
          %s504 = scalar_lea.sflag [#allocation4], %s503
          %s505 = sand.u32 %s122, 1
          %s506 = smul.addr %s505, 256
          %s507 = scalar_lea.vmem [#allocation7], %s506
          %509 = dma.done %s504, 4096
        $region52: #{tpu_custom_call.1} parent=47 // pred_fallthru
          _
      $region48: #{tpu_custom_call.1} parent=5 // pred_fallthru
        _
    $region6: #{tpu_custom_call.1} parent=1 // loop_footer
      %s20 = sadd.s32 1, %s16
    $region7: #{tpu_custom_call.1} parent=1 // loop_footer_branch
      %15 = sbr.rel target = $region3
    $region8: #{tpu_custom_call.1} parent=1 // loop_exit
      _
    %510 = vsyncpa [#allocation3], 1
    %s511 = scalar_lea.sflag [#allocation3], 1
    %512 = vsyncpa %s511, 1
    %513 = vsyncpa [#allocation6], 1
    %514 = vsyncpa [#allocation4], 1
    %s515 = scalar_lea.sflag [#allocation4], 1
    %516 = vsyncpa %s515, 1

</llo_original>
